<compile_context>
chip_gen: v6e
topology: v6e:2x2x1
jax: 0.10.0
libtpu: 0.0.40
codegen_flags: <defaults>
</compile_context>

<pallas_src>
import jax
import jax.numpy as jnp
from jax.experimental import pallas as pl
from jax.experimental.pallas import tpu as pltpu


def _h_sigmoid_kernel(x_ref, o_ref):
    x = x_ref[...]
    dt = x.dtype
    three = jnp.asarray(3.0, dt)
    zero = jnp.asarray(0.0, dt)
    six = jnp.asarray(6.0, dt)
    # relu6(x + 3) / 6  ==  clamp(x + 3, 0, 6) / 6   (dtype-matched, torch parity)
    o_ref[...] = (jnp.clip(x + three, zero, six) / six).astype(o_ref.dtype)


def _choose_layout(total):
    """Pick a lane-dense (rows, cols, pad) 2-D view of the flattened tensor."""
    # Prefer the widest last dim that is a multiple of 128 (long DMA rows,
    # unmasked vst, fewer/larger blocks).
    for cols in (8192, 4096, 2048, 1024, 512, 256, 128):
        if total % cols == 0:
            return total // cols, cols, 0
    # Fallback: pad the flat vector to a multiple of 1024 lanes so stores stay
    # lane-dense; the pad region is sliced off after the kernel.
    cols = 1024
    rows = pl.cdiv(total, cols)
    return rows, cols, rows * cols - total


def h_sigmoid(x):
    """Elementwise hard-sigmoid matching torch: relu6(x + 3) / 6."""
    orig_shape = x.shape
    orig_dtype = x.dtype
    total = 1
    for d in orig_shape:
        total *= int(d)

    rows, cols, pad = _choose_layout(total)
    flat = x.reshape(-1)
    if pad:
        flat = jnp.pad(flat, (0, pad))
    x2 = flat.reshape(rows, cols)

    itemsize = jnp.dtype(orig_dtype).itemsize
    # Sublane packing: 8 for 4-byte, 16 for 2-byte, 32 for 1-byte dtypes.
    packing = max(8, 32 // itemsize)

    # ~6 MiB per input block: 4x (in+out, double-buffered) = ~24 MiB, safely
    # under the explicit 32 MiB vmem limit on every generation.
    target_bytes = 6 * 1024 * 1024
    tr = (target_bytes // max(1, cols * itemsize)) // packing * packing
    tr = max(packing, tr)

    if rows <= packing:
        tr = rows  # block sublane dim == full extent, satisfies (8,128) rule
    elif tr >= rows:
        # Whole array fits one block: still split into >= 2 grid steps so the
        # "parallel" axis can be sharded across v7x's two TensorCores.
        half = (((rows + 1) // 2) + packing - 1) // packing * packing
        tr = half if half < rows else rows

    grid = (pl.cdiv(rows, tr),)

    out2 = pl.pallas_call(
        _h_sigmoid_kernel,
        out_shape=jax.ShapeDtypeStruct((rows, cols), orig_dtype),
        grid_spec=pl.GridSpec(
            grid=grid,
            in_specs=[pl.BlockSpec((tr, cols), lambda i: (i, 0))],
            out_specs=pl.BlockSpec((tr, cols), lambda i: (i, 0)),
        ),
        compiler_params=pltpu.CompilerParams(
            dimension_semantics=("parallel",),
            vmem_limit_bytes=32 * 1024 * 1024,
        ),
    )(x2)

    out_flat = out2.reshape(-1)
    if pad:
        out_flat = out_flat[:total]
    return out_flat.reshape(orig_shape)


def _reference(x):
    dt = x.dtype
    return jnp.clip(x + jnp.asarray(3.0, dt), jnp.asarray(0.0, dt),
                    jnp.asarray(6.0, dt)) / jnp.asarray(6.0, dt)


if __name__ == "__main__":
    key = jax.random.PRNGKey(0)

    # NCHW input like the PyTorch module would receive.
    x = jax.random.normal(key, (2, 4, 16, 16), dtype=jnp.float32) * 4.0
    y = jax.block_until_ready(h_sigmoid(x))
    assert y.shape == x.shape
    assert jnp.allclose(y, _reference(x), atol=1e-6), "mismatch vs reference"

    # Spatial dims not 128-aligned -> padded lane-dense fallback path.
    x2 = jax.random.normal(jax.random.PRNGKey(1), (2, 4, 7, 7),
                           dtype=jnp.float32) * 4.0
    y2 = jax.block_until_ready(h_sigmoid(x2))
    assert y2.shape == x2.shape
    assert jnp.allclose(y2, _reference(x2), atol=1e-6), "mismatch (odd shape)"

    # Larger tensor -> exercises the multi-step pipelined grid path.
    x3 = jax.random.normal(jax.random.PRNGKey(2), (8, 32, 64, 64),
                           dtype=jnp.float32) * 4.0
    y3 = jax.block_until_ready(h_sigmoid(x3))
    assert y3.shape == x3.shape
    assert jnp.allclose(y3, _reference(x3), atol=1e-6), "mismatch (large shape)"

    # bf16 path -> exercises 16-sublane packing rounding.
    x4 = (jax.random.normal(jax.random.PRNGKey(3), (4, 8, 32, 32),
                            dtype=jnp.float32) * 4.0).astype(jnp.bfloat16)
    y4 = jax.block_until_ready(h_sigmoid(x4))
    assert y4.shape == x4.shape
    assert jnp.allclose(y4.astype(jnp.float32),
                        _reference(x4).astype(jnp.float32),
                        atol=1e-2), "mismatch (bf16)"

    print("KERNEL_OK")
</pallas_src>

<mosaic_0001>
module attributes {stable_mosaic.version = 11 : i64} {
  func.func @_h_sigmoid_kernel(%arg0: i32, %arg1: memref<1x2048xf32, #tpu.memory_space<vmem>>, %arg2: memref<1x2048xf32, #tpu.memory_space<vmem>>) attributes {dimension_semantics = [#tpu.dimension_semantics<parallel>], iteration_bounds = array<i64: 1>, scalar_prefetch = 0 : i64, scratch_operands = 0 : i64, tpu.core_type = #tpu.core_type<tc>, window_params = [{transform_indices = @transform_0, window_bounds = array<i64: 1, 2048>}, {transform_indices = @transform_1, window_bounds = array<i64: 1, 2048>}]} {
    %c0 = arith.constant 0 : index
    %c0_0 = arith.constant 0 : index
    %0 = vector.load %arg1[%c0, %c0_0] : memref<1x2048xf32, #tpu.memory_space<vmem>>, vector<1x2048xf32>
    %cst = arith.constant 3.000000e+00 : f32
    %1 = vector.broadcast %cst : f32 to vector<1x2048xf32>
    %2 = arith.addf %0, %1 : vector<1x2048xf32>
    %cst_1 = arith.constant 0.000000e+00 : f32
    %cst_2 = arith.constant 6.000000e+00 : f32
    %3 = vector.broadcast %cst_1 : f32 to vector<1x2048xf32>
    %4 = arith.maximumf %3, %2 : vector<1x2048xf32>
    %5 = vector.broadcast %cst_2 : f32 to vector<1x2048xf32>
    %6 = arith.minimumf %5, %4 : vector<1x2048xf32>
    %cst_3 = arith.constant 6.000000e+00 : f32
    %7 = vector.broadcast %cst_3 : f32 to vector<1x2048xf32>
    %8 = arith.divf %6, %7 : vector<1x2048xf32>
    %c0_4 = arith.constant 0 : index
    %c0_5 = arith.constant 0 : index
    %9 = vector.load %arg2[%c0_4, %c0_5] : memref<1x2048xf32, #tpu.memory_space<vmem>>, vector<1x2048xf32>
    tpu.vector_store %arg2[%c0_4, %c0_5], %8 {strides = array<i32>} : memref<1x2048xf32, #tpu.memory_space<vmem>>, vector<1x2048xf32>,
    return
  }
  func.func @transform_0(%arg0: i32) -> (i32, i32) {
    %c0_i32 = arith.constant 0 : i32
    %c0_i32_0 = arith.constant 0 : i32
    return %arg0, %c0_i32 : i32, i32
  }
  func.func @transform_1(%arg0: i32) -> (i32, i32) {
    %c0_i32 = arith.constant 0 : i32
    %c0_i32_0 = arith.constant 0 : i32
    return %arg0, %c0_i32 : i32, i32
  }
}

</mosaic_0001>

<llo_original>
// kernel: tpu_custom_call.1
$region0: #{tpu_custom_call.1}
  #allocation0 [shape = 'u32[]', space=smem, size = 0x4, offset = 0x4, fixed_abs, tag = 'smem constant byte address 0x4 - core index']
  #allocation1 [shape = 'u32[144,128]{1,0:T(1,128)}', space=vmem, size = 0x12000, scoped, tag = 'internal scratch']
  %s0 = inlined_call_operand.hbm [shape: f32[1,2048], index: 0, kind: input, shape index: {}]
  %s1 = inlined_call_operand.hbm [shape: f32[1,2048], index: 1, kind: output, shape index: {}]
  %s2 = sld [smem:[#allocation0]]
  $region18: #{tpu_custom_call.1} parent=0
    _
  %s4 = ssub.s32 1, %s2
  %s5 = scalar_select 0, %s4, %s2
  $region1: #{tpu_custom_call.1} parent=0
    #allocation2 [shape = 'u8[8192]{0}', space=vmem, size = 0x2000, scoped, tag = 'input window, operand 0, single buffered']
    #allocation3 [shape = 's32[1]{0}', space=sflag, size = 0x4, scoped, tag = 'scoped memory for tpu_custom_call.1']
    #allocation4 [shape = 's32[1]{0}', space=sflag, size = 0x4, scoped, tag = 'scoped memory for tpu_custom_call.1']
    #allocation5 [shape = 'u8[8192]{0}', space=vmem, size = 0x2000, scoped, tag = 'output window, operand 0, single buffered']
    %6 = vsyncpa [#allocation3], 0
    %7 = vsyncpa [#allocation4], 0
    // Predicated region
    $region2: #{tpu_custom_call.1} parent=1 // pred_check
      _
    $region3: #{tpu_custom_call.1} parent=1 // pred_check_branch
      %9 = sbr.rel (0) target = $region5
    $region4: #{tpu_custom_call.1} parent=1 // pred_region
      %s11 = ssub.s32 256, 256
      %12 = vsyncadd [#allocation3], %s11
      %s14 = sshll.u32 [#allocation2], 4
      %s15 = int_to_ptr.vmem [resolvable:$true] %s14
      %17 = dma.hbm_to_vmem [thread:$0]  %s0, 256, %s15, [#allocation3]
    $region5: #{tpu_custom_call.1} parent=1 // pred_fallthru
      _
    // Predicated region
    $region6: #{tpu_custom_call.1} parent=1 // pred_check
      _
    $region7: #{tpu_custom_call.1} parent=1 // pred_check_branch
      %19 = sbr.rel (0) target = $region9
    $region8: #{tpu_custom_call.1} parent=1 // pred_region
      %20 = dma.done [#allocation3], 256
    $region9: #{tpu_custom_call.1} parent=1 // pred_fallthru
      _
    %v21 = vld [vmem:[#allocation2] sm:$0xff]
    %v22 = vld [vmem:[#allocation2 + $0x8] sm:$0xff]
    %v23 = vadd.f32 %v21, 3.0
    %v24 = vadd.f32 %v22, 3.0
    %v25 = vmax.f32 %v23, 0.0
    %v26 = vmax.f32 %v24, 0.0
    %v27 = vmin.f32 %v25, 6.0
    %v28 = vmin.f32 %v26, 6.0
    %v29 = vrcp.pop 6.0
    %v30 = vmul.f32 %v27, %v29
    %v31 = vmul.f32 %v28, %v29
    %32 = vst [vmem:[#allocation5] sm:$0xff] %v30
    %33 = vst [vmem:[#allocation5 + $0x8] sm:$0xff] %v31
    // Predicated region
    $region10: #{tpu_custom_call.1} parent=1 // pred_check
      _
    $region11: #{tpu_custom_call.1} parent=1 // pred_check_branch
      %35 = sbr.rel (0) target = $region13
    $region12: #{tpu_custom_call.1} parent=1 // pred_region
      %s37 = ssub.s32 256, 256
      %38 = vsyncadd [#allocation4], %s37
      %s40 = sshll.u32 [#allocation5], 4
      %s41 = int_to_ptr.vmem [resolvable:$true] %s40
      %43 = dma.vmem_to_hbm [thread:$0]  %s41, 256, %s1, [#allocation4]
    $region13: #{tpu_custom_call.1} parent=1 // pred_fallthru
      _
    // Predicated region
    $region14: #{tpu_custom_call.1} parent=1 // pred_check
      _
    $region15: #{tpu_custom_call.1} parent=1 // pred_check_branch
      %45 = sbr.rel (0) target = $region17
    $region16: #{tpu_custom_call.1} parent=1 // pred_region
      %46 = dma.done [#allocation4], 256
    $region17: #{tpu_custom_call.1} parent=1 // pred_fallthru
      _
    %47 = vsyncpa [#allocation3], 1
    %48 = vsyncpa [#allocation4], 1

</llo_original>
